<compile_context>
chip_gen: v7x
topology: tpu7x:2x2x1
jax: 0.10.0
libtpu: 0.0.40
codegen_flags: <defaults>
</compile_context>

<pallas_src>
import jax
import jax.numpy as jnp
from jax.experimental import pallas as pl
from jax.experimental.pallas import tpu as pltpu

# ----------------------------- configuration ------------------------------
NUM_FRAMES = 2          # T   (cfg.INPUT.SAMPLING_FRAME_NUM)
BATCH = 1               # videos per batch
C_IN = 3                # RGB
H = W = 16              # padded image size (ImageList padding is a no-op here)
HIDDEN = 32             # backbone channels
MASK_DIM = 32           # mask-embedding dim
NUM_QUERIES = 8
NUM_CLASSES = 4         # sem_seg_head.num_classes (logits have K+1)
TOPK = 10               # inference_video keeps top-10

PIXEL_MEAN = (123.675, 116.28, 103.53)
PIXEL_STD = (58.395, 57.12, 57.375)

# derived / padded sizes
NCP1 = NUM_CLASSES + 1                 # 5
K_IM2COL = 9 * C_IN                    # 27
K_PAD = 32                             # im2col K padded (ones column + zeros)
COUT_PAD = 128                         # lane-dense conv output channels
ONES_CH = HIDDEN                       # conv channel that is constant 1.0 (carries bias_q)
HEAD_W = 2 * COUT_PAD                  # packed head width:
                                       #   cols [0, NCP1)                      : class logits
                                       #   cols [COUT_PAD, COUT_PAD+HIDDEN)    : A = mask_embed @ w_maskfeat^T
                                       #   col  COUT_PAD+ONES_CH               : per-query mask bias
N_IMGS = BATCH * NUM_FRAMES
ROWS_PER_IMG = H * W                   # 256 conv pixels (im2col rows) per frame
HF, WF = H // 2, W // 2
PIX_PER_IMG = HF * WF                  # 64 pooled pixels per frame


# ------------------------------ Pallas kernel ------------------------------
def _fused_forward_kernel(a_ref, wconv_ref, pool_ref, q_ref, wcomb_ref, bcomb_ref,
                          probs_ref, masks_ref):
    """Whole eval forward for one frame (one grid step).

    a_ref     : (ROWS_PER_IMG, K_PAD)   bf16  im2col patches (+ ones column)
    wconv_ref : (K_PAD, COUT_PAD)       bf16  conv weight (1/std + bias folded, ones channel)
    pool_ref  : (PIX_PER_IMG, ROWS_PER_IMG) f32 2x2 avg-pool matrix (exact 0.25 taps)
    q_ref     : (NUM_QUERIES, HIDDEN)   f32
    wcomb_ref : (HIDDEN, HEAD_W)        f32   folded cls / mask-embed / mask-feat heads
    bcomb_ref : (1, HEAD_W)             f32
    probs_ref : (NUM_QUERIES, COUT_PAD) f32   class probs in cols [0, NCP1), rest 0
    masks_ref : (NUM_QUERIES, PIX_PER_IMG) f32
    """
    # backbone stand-in: im2col matmul (bf16 MXU, f32 acc) + f32 ReLU
    feats = jnp.maximum(
        jnp.dot(a_ref[...], wconv_ref[...], preferred_element_type=jnp.float32), 0.0)

    # pixel-decoder stand-in: 2x2 avg pool as an exact f32 matmul (stays in VMEM)
    pooled = jnp.dot(pool_ref[...], feats, preferred_element_type=jnp.float32)  # (PIX, 128)

    # fused heads: one affine map of the queries (cls logits + mask-embed/mask-feat fold)
    y = (jnp.dot(q_ref[...], wcomb_ref[...], preferred_element_type=jnp.float32)
         + bcomb_ref[...])                                                       # (Q, 256)

    # softmax over the class columns (exact division, no approx reciprocal)
    col = jax.lax.broadcasted_iota(jnp.int32, y.shape, 1)
    is_cls = col < NCP1
    m = jnp.max(jnp.where(is_cls, y, -jnp.inf), axis=-1, keepdims=True)
    e = jnp.exp(jnp.where(is_cls, y, -jnp.inf) - m)          # masked -> exp(-inf)=0
    s = jnp.sum(e, axis=-1, keepdims=True)
    probs = e / s
    probs_ref[...] = probs[:, :COUT_PAD].astype(probs_ref.dtype)   # lane-dense 128-wide store

    # mask einsum: cols [COUT_PAD:] of y are channel-aligned with `pooled`
    # (a_embed in channels [0,HIDDEN), bias_q on the constant-1 channel ONES_CH)
    y_mask = y[:, COUT_PAD:]                                         # (Q, 128)
    masks = jax.lax.dot_general(
        y_mask, pooled,
        dimension_numbers=(((1,), (1,)), ((), ())),
        preferred_element_type=jnp.float32)                          # (Q, PIX)
    masks_ref[...] = masks.astype(masks_ref.dtype)


def fused_forward(a_bf16, w_conv_bf16, pool_f32, queries_f32, w_comb_f32, b_comb_f32):
    """One pallas_call for the whole eval forward; grid over frames (parallel)."""
    return pl.pallas_call(
        _fused_forward_kernel,
        out_shape=(
            jax.ShapeDtypeStruct((N_IMGS, NUM_QUERIES, COUT_PAD), jnp.float32),
            jax.ShapeDtypeStruct((N_IMGS, NUM_QUERIES, PIX_PER_IMG), jnp.float32),
        ),
        grid=(N_IMGS,),
        in_specs=[
            pl.BlockSpec((ROWS_PER_IMG, K_PAD), lambda i: (i, 0)),        # per-frame im2col rows
            pl.BlockSpec((K_PAD, COUT_PAD), lambda i: (0, 0)),            # resident weight
            pl.BlockSpec((PIX_PER_IMG, ROWS_PER_IMG), lambda i: (0, 0)),  # resident pool matrix
            pl.BlockSpec((NUM_QUERIES, HIDDEN), lambda i: (0, 0)),
            pl.BlockSpec((HIDDEN, HEAD_W), lambda i: (0, 0)),
            pl.BlockSpec((1, HEAD_W), lambda i: (0, 0)),
        ],
        out_specs=(
            pl.BlockSpec((None, NUM_QUERIES, COUT_PAD), lambda i: (i, 0, 0)),
            pl.BlockSpec((None, NUM_QUERIES, PIX_PER_IMG), lambda i: (i, 0, 0)),
        ),
        compiler_params=pltpu.CompilerParams(dimension_semantics=("parallel",)),
    )(a_bf16, w_conv_bf16, pool_f32, queries_f32, w_comb_f32, b_comb_f32)


# ---------------------------- parameter folding ----------------------------
def _fold_conv_params(params):
    """Fold 1/pixel_std + conv bias into one lane-dense weight; add a constant-1
    output channel (ONES_CH) that carries the per-query mask bias later."""
    std = jnp.asarray(PIXEL_STD, jnp.float32)
    w_scaled = params["w_backbone"] / std[None, None, :, None]        # (3,3,Cin,HID)
    w_mat = w_scaled.reshape(K_IM2COL, HIDDEN)
    w_pad = jnp.zeros((K_PAD, COUT_PAD), jnp.float32)
    w_pad = w_pad.at[:K_IM2COL, :HIDDEN].set(w_mat)
    w_pad = w_pad.at[K_IM2COL, :HIDDEN].set(params["b_backbone"])     # bias via ones column
    w_pad = w_pad.at[K_IM2COL, ONES_CH].set(1.0)                      # constant-1 channel
    return w_pad


def _fold_head_params(params):
    """Fold cls head, mask-embed head and the 1x1 mask-feature conv into a single
    affine map of the queries (exact, f32):
        A      = mask_embed @ w_maskfeat^T = q @ (w_me @ w_mf^T) + b_me @ w_mf^T
        bias_q = mask_embed @ b_maskfeat   = q @ (w_me @ b_mf)   + b_me . b_mf
    The A block is placed channel-aligned at cols [COUT_PAD, ...) so the mask
    matmul contracts directly against the pooled conv channels."""
    w_a = params["w_maskembed"] @ params["w_maskfeat"].T              # (HID, HID)
    b_a = params["b_maskembed"] @ params["w_maskfeat"].T              # (HID,)
    w_bq = params["w_maskembed"] @ params["b_maskfeat"]               # (HID,)
    b_bq = params["b_maskembed"] @ params["b_maskfeat"]               # scalar

    w_comb = jnp.zeros((HIDDEN, HEAD_W), jnp.float32)
    w_comb = w_comb.at[:, :NCP1].set(params["w_cls"])
    w_comb = w_comb.at[:, COUT_PAD:COUT_PAD + HIDDEN].set(w_a)
    w_comb = w_comb.at[:, COUT_PAD + ONES_CH].set(w_bq)

    b_comb = jnp.zeros((1, HEAD_W), jnp.float32)
    b_comb = b_comb.at[0, :NCP1].set(params["b_cls"])
    b_comb = b_comb.at[0, COUT_PAD:COUT_PAD + HIDDEN].set(b_a)
    b_comb = b_comb.at[0, COUT_PAD + ONES_CH].set(b_bq)
    return w_comb, b_comb


def _build_pool_matrix():
    """(PIX_PER_IMG, ROWS_PER_IMG) f32 matrix performing an exact 2x2 average pool."""
    rows = jnp.arange(ROWS_PER_IMG)
    r, c = rows // W, rows % W
    out_idx = (r // 2) * WF + (c // 2)
    onehot = jnp.arange(PIX_PER_IMG)[:, None] == out_idx[None, :]
    return onehot.astype(jnp.float32) * 0.25


# ------------------------------ forward pass -------------------------------
def _forward_impl(frames_nchw, params, *, output_height, output_width):
    # normalize: subtract mean in f32 (fuses with pad/slices), 1/std folded into weights;
    # im2col built directly in bf16 (review item).
    mean = jnp.asarray(PIXEL_MEAN, jnp.float32)
    x = jnp.transpose(frames_nchw, (0, 2, 3, 1)).astype(jnp.float32) - mean
    x = x.astype(jnp.bfloat16)

    xpad = jnp.pad(x, ((0, 0), (1, 1), (1, 1), (0, 0)))
    taps = [xpad[:, dy:dy + H, dx:dx + W, :] for dy in range(3) for dx in range(3)]
    m_rows = N_IMGS * ROWS_PER_IMG
    patches = jnp.concatenate(taps, axis=-1).reshape(m_rows, K_IM2COL)
    a = jnp.concatenate(
        [patches,
         jnp.ones((m_rows, 1), jnp.bfloat16),                          # bias / ones column
         jnp.zeros((m_rows, K_PAD - K_IM2COL - 1), jnp.bfloat16)],
        axis=-1)

    w_conv = _fold_conv_params(params).astype(jnp.bfloat16)
    w_comb, b_comb = _fold_head_params(params)
    pool_mat = _build_pool_matrix()
    queries = params["queries"].astype(jnp.float32)

    # ---- single fused Pallas kernel: conv+ReLU -> pool -> heads -> masks ----
    probs_pad, masks = fused_forward(a, w_conv, pool_mat, queries, w_comb, b_comb)

    probs = probs_pad[0, :, :NCP1]                                     # identical per frame
    pred_masks = masks.reshape(BATCH, NUM_FRAMES, NUM_QUERIES, HF, WF)
    pred_masks = pred_masks.transpose(0, 2, 1, 3, 4)                   # (B, Q, T, hf, wf)

    # ---------------------------- inference_video ---------------------------
    scores = probs[:, :-1]                                             # (Q, K)
    labels = jnp.tile(jnp.arange(NUM_CLASSES, dtype=jnp.int32),
                      (NUM_QUERIES, 1)).reshape(-1)
    scores_per_image, topk_indices = jax.lax.top_k(scores.reshape(-1), TOPK)
    labels_per_image = labels[topk_indices]
    q_idx = topk_indices // NUM_CLASSES

    # Gather TOPK masks first, one bilinear resize straight to the output size.
    # Exact vs. the reference: padded size == image size == output size, so the
    # crop is a no-op and the reference's second resize is the identity.
    sel_lr = pred_masks[0][q_idx]                                      # (TOPK, T, hf, wf)
    sel = jax.image.resize(sel_lr, (TOPK, NUM_FRAMES, output_height, output_width),
                           method="linear")
    masks_bool = sel > 0.0
    return scores_per_image, labels_per_image, masks_bool


_forward_jit = jax.jit(_forward_impl, static_argnames=("output_height", "output_width"))


def video_maskformer_forward(frames_nchw, params, output_height, output_width):
    scores, labels, masks = _forward_jit(frames_nchw, params,
                                         output_height=output_height,
                                         output_width=output_width)
    return {
        "image_size": (output_height, output_width),
        "pred_scores": scores,
        "pred_labels": labels,
        "pred_masks": masks,
    }


# ---------------------------------- main -----------------------------------
if __name__ == "__main__":
    key = jax.random.PRNGKey(0)
    keys = jax.random.split(key, 8)

    # "video" input like the DatasetMapper output: frames in (C, H, W) format.
    frames_nchw = jax.random.uniform(
        keys[0], (BATCH * NUM_FRAMES, C_IN, H, W), dtype=jnp.float32,
        minval=0.0, maxval=255.0,
    )

    def nrm(k, shape, scale):
        return jax.random.normal(k, shape, dtype=jnp.float32) * scale

    params = {
        "w_backbone": nrm(keys[1], (3, 3, C_IN, HIDDEN), 0.05),
        "b_backbone": jnp.zeros((HIDDEN,), jnp.float32),
        "w_maskfeat": nrm(keys[2], (HIDDEN, MASK_DIM), 0.1),
        "b_maskfeat": jnp.zeros((MASK_DIM,), jnp.float32),
        "queries": nrm(keys[3], (NUM_QUERIES, HIDDEN), 0.5),
        "w_cls": nrm(keys[4], (HIDDEN, NUM_CLASSES + 1), 0.5),
        "b_cls": jnp.zeros((NUM_CLASSES + 1,), jnp.float32),
        "w_maskembed": nrm(keys[5], (HIDDEN, MASK_DIM), 0.5),
        "b_maskembed": jnp.zeros((MASK_DIM,), jnp.float32),
    }

    out = video_maskformer_forward(frames_nchw, params,
                                   output_height=H, output_width=W)

    jax.block_until_ready(out["pred_scores"])
    jax.block_until_ready(out["pred_labels"])
    jax.block_until_ready(out["pred_masks"])

    # Mirror torch .tolist() semantics for scores/labels.
    pred_scores = [float(s) for s in out["pred_scores"]]
    pred_labels = [int(l) for l in out["pred_labels"]]
    assert len(pred_scores) == TOPK and len(pred_labels) == TOPK
    assert out["pred_masks"].shape == (TOPK, NUM_FRAMES, H, W)
    assert out["pred_masks"].dtype == jnp.bool_

    print("KERNEL_OK")
</pallas_src>

<mosaic_0001>
module attributes {stable_mosaic.version = 11 : i64} {
  func.func @_fused_forward_kernel(%arg0: i32, %arg1: memref<256x32xbf16, #tpu.memory_space<vmem>>, %arg2: memref<32x128xbf16, #tpu.memory_space<vmem>>, %arg3: memref<64x256xf32, #tpu.memory_space<vmem>>, %arg4: memref<8x32xf32, #tpu.memory_space<vmem>>, %arg5: memref<32x256xf32, #tpu.memory_space<vmem>>, %arg6: memref<1x256xf32, #tpu.memory_space<vmem>>, %arg7: memref<1x8x128xf32, #tpu.memory_space<vmem>>, %arg8: memref<1x8x64xf32, #tpu.memory_space<vmem>>) attributes {dimension_semantics = [#tpu.dimension_semantics<parallel>], iteration_bounds = array<i64: 2>, scalar_prefetch = 0 : i64, scratch_operands = 0 : i64, tpu.core_type = #tpu.core_type<tc>, window_params = [{transform_indices = @transform_0, window_bounds = array<i64: 256, 32>}, {pipeline_mode = #tpu.pipeline_mode<synchronous>, transform_indices = @transform_1, window_bounds = array<i64: 32, 128>}, {pipeline_mode = #tpu.pipeline_mode<synchronous>, transform_indices = @transform_2, window_bounds = array<i64: 64, 256>}, {pipeline_mode = #tpu.pipeline_mode<synchronous>, transform_indices = @transform_3, window_bounds = array<i64: 8, 32>}, {pipeline_mode = #tpu.pipeline_mode<synchronous>, transform_indices = @transform_4, window_bounds = array<i64: 32, 256>}, {pipeline_mode = #tpu.pipeline_mode<synchronous>, transform_indices = @transform_5, window_bounds = array<i64: 1, 256>}, {transform_indices = @transform_6, window_bounds = array<i64: 1, 8, 128>}, {transform_indices = @transform_7, window_bounds = array<i64: 1, 8, 64>}]} {
    %c0 = arith.constant 0 : index
    %c0_0 = arith.constant 0 : index
    %0 = vector.load %arg1[%c0, %c0_0] : memref<256x32xbf16, #tpu.memory_space<vmem>>, vector<256x32xbf16>
    %c0_1 = arith.constant 0 : index
    %c0_2 = arith.constant 0 : index
    %1 = vector.load %arg2[%c0_1, %c0_2] : memref<32x128xbf16, #tpu.memory_space<vmem>>, vector<32x128xbf16>
    %cst = arith.constant dense<0.000000e+00> : vector<256x128xf32>
    %2 = tpu.matmul %0, %1, %cst {dimension_numbers = #tpu.dot_dimension_numbers<[1], [0], [0], [1], [0, 0, 1, 1], [], []>} : vector<256x32xbf16>, vector<32x128xbf16>, vector<256x128xf32> -> vector<256x128xf32>
    %cst_3 = arith.constant 0.000000e+00 : f32
    %3 = vector.broadcast %cst_3 : f32 to vector<256x128xf32>
    %4 = arith.maximumf %2, %3 : vector<256x128xf32>
    %c0_4 = arith.constant 0 : index
    %c0_5 = arith.constant 0 : index
    %5 = vector.load %arg3[%c0_4, %c0_5] : memref<64x256xf32, #tpu.memory_space<vmem>>, vector<64x256xf32>
    %cst_6 = arith.constant dense<0.000000e+00> : vector<64x128xf32>
    %6 = tpu.matmul %5, %4, %cst_6 {dimension_numbers = #tpu.dot_dimension_numbers<[1], [0], [0], [1], [0, 0, 1, 1], [], []>} : vector<64x256xf32>, vector<256x128xf32>, vector<64x128xf32> -> vector<64x128xf32>
    %c0_7 = arith.constant 0 : index
    %c0_8 = arith.constant 0 : index
    %7 = vector.load %arg4[%c0_7, %c0_8] : memref<8x32xf32, #tpu.memory_space<vmem>>, vector<8x32xf32>
    %c0_9 = arith.constant 0 : index
    %c0_10 = arith.constant 0 : index
    %8 = vector.load %arg5[%c0_9, %c0_10] : memref<32x256xf32, #tpu.memory_space<vmem>>, vector<32x256xf32>
    %cst_11 = arith.constant dense<0.000000e+00> : vector<8x256xf32>
    %9 = tpu.matmul %7, %8, %cst_11 {dimension_numbers = #tpu.dot_dimension_numbers<[1], [0], [0], [1], [0, 0, 1, 1], [], []>} : vector<8x32xf32>, vector<32x256xf32>, vector<8x256xf32> -> vector<8x256xf32>
    %c0_12 = arith.constant 0 : index
    %c0_13 = arith.constant 0 : index
    %10 = vector.load %arg6[%c0_12, %c0_13] : memref<1x256xf32, #tpu.memory_space<vmem>>, vector<1x256xf32>
    %11 = vector.broadcast %10 : vector<1x256xf32> to vector<8x256xf32>
    %12 = arith.addf %9, %11 : vector<8x256xf32>
    %13 = tpu.iota {dimensions = array<i32: 1>} : vector<8x256xi32>
    %c5_i32 = arith.constant 5 : i32
    %14 = vector.broadcast %c5_i32 : i32 to vector<8x256xi32>
    %15 = arith.cmpi slt, %13, %14 : vector<8x256xi32>
    %cst_14 = arith.constant 0xFF800000 : f32
    %16 = vector.broadcast %cst_14 : f32 to vector<8x256xf32>
    %17 = arith.select %15, %12, %16 : vector<8x256xi1>, vector<8x256xf32>
    %cst_15 = arith.constant dense<0xFF800000> : vector<8xf32>
    %18 = vector.multi_reduction <maximumf>, %17, %cst_15 [1] : vector<8x256xf32> to vector<8xf32>
    %19 = vector.shape_cast %18 : vector<8xf32> to vector<8x1xf32>
    %cst_16 = arith.constant 0xFF800000 : f32
    %20 = vector.broadcast %cst_16 : f32 to vector<8x256xf32>
    %21 = arith.select %15, %12, %20 : vector<8x256xi1>, vector<8x256xf32>
    %22 = vector.broadcast %19 : vector<8x1xf32> to vector<8x256xf32>
    %23 = arith.subf %21, %22 : vector<8x256xf32>
    %24 = math.exp %23 : vector<8x256xf32>
    %cst_17 = arith.constant dense<0.000000e+00> : vector<8xf32>
    %25 = vector.multi_reduction <add>, %24, %cst_17 [1] : vector<8x256xf32> to vector<8xf32>
    %26 = vector.shape_cast %25 : vector<8xf32> to vector<8x1xf32>
    %27 = vector.broadcast %26 : vector<8x1xf32> to vector<8x256xf32>
    %28 = arith.divf %24, %27 : vector<8x256xf32>
    %29 = vector.extract_strided_slice %28 {offsets = [0, 0], sizes = [8, 128], strides = [1, 1]} : vector<8x256xf32> to vector<8x128xf32>
    %c0_18 = arith.constant 0 : index
    %c0_19 = arith.constant 0 : index
    %c0_20 = arith.constant 0 : index
    %30 = vector.load %arg7[%c0_18, %c0_19, %c0_20] : memref<1x8x128xf32, #tpu.memory_space<vmem>>, vector<1x8x128xf32>
    %31 = vector.shape_cast %30 : vector<1x8x128xf32> to vector<8x128xf32>
    %32 = vector.shape_cast %29 : vector<8x128xf32> to vector<1x8x128xf32>
    tpu.vector_store %arg7[%c0_18, %c0_19, %c0_20], %32 {strides = array<i32>} : memref<1x8x128xf32, #tpu.memory_space<vmem>>, vector<1x8x128xf32>,
    %33 = vector.extract_strided_slice %12 {offsets = [0, 128], sizes = [8, 128], strides = [1, 1]} : vector<8x256xf32> to vector<8x128xf32>
    %cst_21 = arith.constant dense<0.000000e+00> : vector<8x64xf32>
    %34 = tpu.matmul %33, %6, %cst_21 {dimension_numbers = #tpu.dot_dimension_numbers<[1], [1], [0], [0], [0, 0, 1, 0], [], []>} : vector<8x128xf32>, vector<64x128xf32>, vector<8x64xf32> -> vector<8x64xf32>
    %c0_22 = arith.constant 0 : index
    %c0_23 = arith.constant 0 : index
    %c0_24 = arith.constant 0 : index
    %35 = vector.load %arg8[%c0_22, %c0_23, %c0_24] : memref<1x8x64xf32, #tpu.memory_space<vmem>>, vector<1x8x64xf32>
    %36 = vector.shape_cast %35 : vector<1x8x64xf32> to vector<8x64xf32>
    %37 = vector.shape_cast %34 : vector<8x64xf32> to vector<1x8x64xf32>
    tpu.vector_store %arg8[%c0_22, %c0_23, %c0_24], %37 {strides = array<i32>} : memref<1x8x64xf32, #tpu.memory_space<vmem>>, vector<1x8x64xf32>,
    return
  }
  func.func @transform_0(%arg0: i32) -> (i32, i32) {
    %c0_i32 = arith.constant 0 : i32
    %c0_i32_0 = arith.constant 0 : i32
    return %arg0, %c0_i32 : i32, i32
  }
  func.func @transform_1(%arg0: i32) -> (i32, i32) {
    %c0_i32 = arith.constant 0 : i32
    %c0_i32_0 = arith.constant 0 : i32
    %c0_i32_1 = arith.constant 0 : i32
    return %c0_i32, %c0_i32_0 : i32, i32
  }
  func.func @transform_2(%arg0: i32) -> (i32, i32) {
    %c0_i32 = arith.constant 0 : i32
    %c0_i32_0 = arith.constant 0 : i32
    %c0_i32_1 = arith.constant 0 : i32
    return %c0_i32, %c0_i32_0 : i32, i32
  }
  func.func @transform_3(%arg0: i32) -> (i32, i32) {
    %c0_i32 = arith.constant 0 : i32
    %c0_i32_0 = arith.constant 0 : i32
    %c0_i32_1 = arith.constant 0 : i32
    return %c0_i32, %c0_i32_0 : i32, i32
  }
  func.func @transform_4(%arg0: i32) -> (i32, i32) {
    %c0_i32 = arith.constant 0 : i32
    %c0_i32_0 = arith.constant 0 : i32
    %c0_i32_1 = arith.constant 0 : i32
    return %c0_i32, %c0_i32_0 : i32, i32
  }
  func.func @transform_5(%arg0: i32) -> (i32, i32) {
    %c0_i32 = arith.constant 0 : i32
    %c0_i32_0 = arith.constant 0 : i32
    %c0_i32_1 = arith.constant 0 : i32
    return %c0_i32, %c0_i32_0 : i32, i32
  }
  func.func @transform_6(%arg0: i32) -> (i32, i32, i32) {
    %c0_i32 = arith.constant 0 : i32
    %c0_i32_0 = arith.constant 0 : i32
    %c0_i32_1 = arith.constant 0 : i32
    return %arg0, %c0_i32, %c0_i32_0 : i32, i32, i32
  }
  func.func @transform_7(%arg0: i32) -> (i32, i32, i32) {
    %c0_i32 = arith.constant 0 : i32
    %c0_i32_0 = arith.constant 0 : i32
    %c0_i32_1 = arith.constant 0 : i32
    return %arg0, %c0_i32, %c0_i32_0 : i32, i32, i32
  }
}

</mosaic_0001>

<llo_original>
// kernel: tile.7
$region0: #{tile.7}
  %s0 = inlined_call_operand.vmem [shape: s32[8,1,1,4], index: 0, kind: input, shape index: {}]
  %s1 = inlined_call_operand.vmem [shape: s32[32], index: 1, kind: output, shape index: {}]
  $region1: #{tile.7} parent=0
    #allocation0 [shape = 'u8[4096]{0}', space=vmem, size = 0x1000, scoped, tag = 'scoped mem for output reshape']
    %v2 = vld [vmem:[%s0] sm:$0x1]
    %vm3 = vcmask 31744
    %4 = vst.msk [vmem:[#allocation0] sm:$0x1] %vm3, %v2
    %s5 = scalar_lea.vmem %s0, 7
    %v6 = vld [vmem:[%s5] sm:$0x1]
    %7 = vrot.lane.b32.xlu0 %v6, 28
    %v8 = vpop.permute.xlu0 %7
    %vm9 = vcmask 261344
    %10 = vst.msk [vmem:[#allocation0] sm:$0x1] %vm9, %v8
    %s11 = scalar_lea.vmem %s0, 6
    %v12 = vld [vmem:[%s11] sm:$0x1]
    %13 = vrot.lane.b32.xlu0 %v12, 24
    %v14 = vpop.permute.xlu0 %13
    %vm15 = vcmask 228544
    %16 = vst.msk [vmem:[#allocation0] sm:$0x1] %vm15, %v14
    %s17 = scalar_lea.vmem %s0, 5
    %v18 = vld [vmem:[%s17] sm:$0x1]
    %19 = vrot.lane.b32.xlu0 %v18, 20
    %v20 = vpop.permute.xlu0 %19
    %vm21 = vcmask 195744
    %22 = vst.msk [vmem:[#allocation0] sm:$0x1] %vm21, %v20
    %s23 = scalar_lea.vmem %s0, 4
    %v24 = vld [vmem:[%s23] sm:$0x1]
    %25 = vrot.lane.b32.xlu0 %v24, 16
    %v26 = vpop.permute.xlu0 %25
    %vm27 = vcmask 162944
    %28 = vst.msk [vmem:[#allocation0] sm:$0x1] %vm27, %v26
    %s29 = scalar_lea.vmem %s0, 3
    %v30 = vld [vmem:[%s29] sm:$0x1]
    %31 = vrot.lane.b32.xlu0 %v30, 12
    %v32 = vpop.permute.xlu0 %31
    %vm33 = vcmask 130144
    %34 = vst.msk [vmem:[#allocation0] sm:$0x1] %vm33, %v32
    %s35 = scalar_lea.vmem %s0, 2
    %v36 = vld [vmem:[%s35] sm:$0x1]
    %37 = vrot.lane.b32.xlu0 %v36, 8
    %v38 = vpop.permute.xlu0 %37
    %vm39 = vcmask 97344
    %40 = vst.msk [vmem:[#allocation0] sm:$0x1] %vm39, %v38
    %s41 = scalar_lea.vmem %s0, 1
    %v42 = vld [vmem:[%s41] sm:$0x1]
    %43 = vrot.lane.b32.xlu0 %v42, 4
    %v44 = vpop.permute.xlu0 %43
    %vm45 = vcmask 64544
    %46 = vst.msk [vmem:[#allocation0] sm:$0x1] %vm45, %v44
    %s48 = sshllo.u32 0, 1
    %v50 = vld [vmem:[#allocation0] sm:%s48]
    %s51 = sshllo.u32 0, 1
    %52 = vst [vmem:[%s1] sm:%s51] %v50

// kernel: _forward_impl.1
$region0: #{_forward_impl.1}
  #allocation0 [shape = 'u32[]', space=smem, size = 0x4, offset = 0x4, fixed_abs, tag = 'smem constant byte address 0x4 - core index']
  #allocation1 [shape = 'u32[144,128]{1,0:T(1,128)}', space=vmem, size = 0x12000, scoped, tag = 'internal scratch']
  %s0 = inlined_call_operand.vmem [shape: bf16[512,32], index: 0, kind: input, shape index: {}]
  %s1 = inlined_call_operand.vmem [shape: bf16[32,128], index: 1, kind: input, shape index: {}]
  %s2 = inlined_call_operand.vmem [shape: f32[64,256], index: 2, kind: input, shape index: {}]
  %s3 = inlined_call_operand.vmem [shape: f32[8,32], index: 3, kind: input, shape index: {}]
  %s4 = inlined_call_operand.vmem [shape: f32[32,256], index: 4, kind: input, shape index: {}]
  %s5 = inlined_call_operand.vmem [shape: f32[1,256], index: 5, kind: input, shape index: {}]
  %s6 = inlined_call_operand.vmem [shape: f32[2,8,128], index: 6, kind: output, shape index: {0}]
  %s7 = inlined_call_operand.vmem [shape: f32[2,8,64], index: 7, kind: output, shape index: {1}]
  %8 = xla_tuple %s6, %s7
  %s9 = sld [smem:[#allocation0]]
  $region65: #{_forward_impl.1} parent=0
    _
  %s11 = ssub.s32 1, %s9
  %s12 = scalar_select 0, %s11, %s9
  loop: start=0, step=1, limit=4
  $region2: #{_forward_impl.1} parent=0 // loop_pre_header
    _
  $region3: #{_forward_impl.1} parent=0 // loop_header
    %s14 = sphi 0, %s18
    %p15 = scmp.ge.s32.totalorder %s14, 4
    %s24 = sphi 0, %s26
    %s27 = sphi 0, %s24
    %s28 = sphi 0, %s27
    %s44 = sphi 0, %s28
    %s48 = sphi 0, %s48
    %s50 = sphi 0, %s48
    %s51 = sphi 0, %s50
    %s65 = sphi 0, %s51
    %s69 = sphi 0, %s69
    %s71 = sphi 0, %s69
    %s72 = sphi 0, %s71
    %s86 = sphi 0, %s72
    %s90 = sphi 0, %s90
    %s92 = sphi 0, %s90
    %s93 = sphi 0, %s92
    %s107 = sphi 0, %s93
    %s111 = sphi 0, %s111
    %s113 = sphi 0, %s111
    %s114 = sphi 0, %s113
    %s128 = sphi 0, %s114
    %s132 = sphi 0, %s132
    %s134 = sphi 0, %s132
    %s135 = sphi 0, %s134
    %s149 = sphi 0, %s135
    %s155 = sphi 0, %s157
    %s158 = sphi 0, %s155
    %s159 = sphi 0, %s158
    %s175 = sphi 0, %s159
    %s181 = sphi 0, %s183
    %s184 = sphi 0, %s181
    %s185 = sphi 0, %s184
    %s201 = sphi 0, %s185
  $region4: #{_forward_impl.1} parent=0 // loop_header_branch
    %17 = sbr.rel (%p15) target = $region8
  $region5: #{_forward_impl.1} parent=0 // loop_body
    %s19 = ssub.s32 %s14, 1
    %s20 = ssub.s32 %s14, 2
    %s21 = sadd.s32 %s14, 1
    %s22 = ssub.s32 %s14, %s21
    %p23 = scmp.eq.s32.totalorder %s22, 0
    %s25 = sadd.s32 %s24, 1
    %s26 = scalar_select %p23, %s24, %s25
    %p29 = pneg %p23
    %p30 = scmp.eq.s32.totalorder %s14, 1
    %p31 = por %p29, %p30
    %p32 = scmp.ne.s32.totalorder %s24, %s27
    %p33 = scmp.eq.s32.totalorder %s14, 0
    %p34 = por %p32, %p33
    %p35 = scmp.ne.s32.totalorder %s24, %s27
    %p36 = scmp.eq.s32.totalorder %s19, 1
    %p37 = por %p35, %p36
    %p38 = scmp.ne.s32.totalorder %s27, %s28
    %p39 = scmp.eq.s32.totalorder %s19, 0
    %p40 = por %p38, %p39
    %p41 = scmp.ne.s32.totalorder %s27, %s28
    %p42 = scmp.eq.s32.totalorder %s20, 1
    %p43 = por %p41, %p42
    %p45 = scmp.ne.s32.totalorder %s28, %s44
    %p46 = scmp.eq.s32.totalorder %s20, 0
    %p47 = por %p45, %p46
    %s49 = sadd.s32 %s48, 1
    %p52 = scmp.eq.s32.totalorder %s14, 1
    %p53 = scmp.ne.s32.totalorder %s48, %s50
    %p54 = scmp.eq.s32.totalorder %s14, 0
    %p55 = por %p53, %p54
    %p56 = scmp.ne.s32.totalorder %s48, %s50
    %p57 = scmp.eq.s32.totalorder %s19, 1
    %p58 = por %p56, %p57
    %p59 = scmp.ne.s32.totalorder %s50, %s51
    %p60 = scmp.eq.s32.totalorder %s19, 0
    %p61 = por %p59, %p60
    %p62 = scmp.ne.s32.totalorder %s50, %s51
    %p63 = scmp.eq.s32.totalorder %s20, 1
    %p64 = por %p62, %p63
    %p66 = scmp.ne.s32.totalorder %s51, %s65
    %p67 = scmp.eq.s32.totalorder %s20, 0
    %p68 = por %p66, %p67
    %s70 = sadd.s32 %s69, 1
    %p73 = scmp.eq.s32.totalorder %s14, 1
    %p74 = scmp.ne.s32.totalorder %s69, %s71
    %p75 = scmp.eq.s32.totalorder %s14, 0
    %p76 = por %p74, %p75
    %p77 = scmp.ne.s32.totalorder %s69, %s71
    %p78 = scmp.eq.s32.totalorder %s19, 1
    %p79 = por %p77, %p78
    %p80 = scmp.ne.s32.totalorder %s71, %s72
    %p81 = scmp.eq.s32.totalorder %s19, 0
    %p82 = por %p80, %p81
    %p83 = scmp.ne.s32.totalorder %s71, %s72
    %p84 = scmp.eq.s32.totalorder %s20, 1
    %p85 = por %p83, %p84
    %p87 = scmp.ne.s32.totalorder %s72, %s86
    %p88 = scmp.eq.s32.totalorder %s20, 0
    %p89 = por %p87, %p88
    %s91 = sadd.s32 %s90, 1
    %p94 = scmp.eq.s32.totalorder %s14, 1
    %p95 = scmp.ne.s32.totalorder %s90, %s92
    %p96 = scmp.eq.s32.totalorder %s14, 0
    %p97 = por %p95, %p96
    %p98 = scmp.ne.s32.totalorder %s90, %s92
    %p99 = scmp.eq.s32.totalorder %s19, 1
    %p100 = por %p98, %p99
    %p101 = scmp.ne.s32.totalorder %s92, %s93
    %p102 = scmp.eq.s32.totalorder %s19, 0
    %p103 = por %p101, %p102
    %p104 = scmp.ne.s32.totalorder %s92, %s93
    %p105 = scmp.eq.s32.totalorder %s20, 1
    %p106 = por %p104, %p105
    %p108 = scmp.ne.s32.totalorder %s93, %s107
    %p109 = scmp.eq.s32.totalorder %s20, 0
    %p110 = por %p108, %p109
    %s112 = sadd.s32 %s111, 1
    %p115 = scmp.eq.s32.totalorder %s14, 1
    %p116 = scmp.ne.s32.totalorder %s111, %s113
    %p117 = scmp.eq.s32.totalorder %s14, 0
    %p118 = por %p116, %p117
    %p119 = scmp.ne.s32.totalorder %s111, %s113
    %p120 = scmp.eq.s32.totalorder %s19, 1
    %p121 = por %p119, %p120
    %p122 = scmp.ne.s32.totalorder %s113, %s114
    %p123 = scmp.eq.s32.totalorder %s19, 0
    %p124 = por %p122, %p123
    %p125 = scmp.ne.s32.totalorder %s113, %s114
    %p126 = scmp.eq.s32.totalorder %s20, 1
    %p127 = por %p125, %p126
    %p129 = scmp.ne.s32.totalorder %s114, %s128
    %p130 = scmp.eq.s32.totalorder %s20, 0
    %p131 = por %p129, %p130
    %s133 = sadd.s32 %s132, 1
    %p136 = scmp.eq.s32.totalorder %s14, 1
    %p137 = scmp.ne.s32.totalorder %s132, %s134
    %p138 = scmp.eq.s32.totalorder %s14, 0
    %p139 = por %p137, %p138
    %p140 = scmp.ne.s32.totalorder %s132, %s134
    %p141 = scmp.eq.s32.totalorder %s19, 1
    %p142 = por %p140, %p141
    %p143 = scmp.ne.s32.totalorder %s134, %s135
    %p144 = scmp.eq.s32.totalorder %s19, 0
    %p145 = por %p143, %p144
    %p146 = scmp.ne.s32.totalorder %s134, %s135
    %p147 = scmp.eq.s32.totalorder %s20, 1
    %p148 = por %p146, %p147
    %p150 = scmp.ne.s32.totalorder %s135, %s149
    %p151 = scmp.eq.s32.totalorder %s20, 0
    %p152 = por %p150, %p151
    %s153 = ssub.s32 %s14, %s21
    %p154 = scmp.eq.s32.totalorder %s153, 0
    %s156 = sadd.s32 %s155, 1
    %s157 = scalar_select %p154, %s155, %s156
    %p160 = pneg %p154
    %p161 = scmp.eq.s32.totalorder %s14, 1
    %p162 = por %p160, %p161
    %p163 = scmp.ne.s32.totalorder %s155, %s158
    %p164 = scmp.eq.s32.totalorder %s14, 0
    %p165 = por %p163, %p164
    %p166 = scmp.ne.s32.totalorder %s155, %s158
    %p167 = scmp.eq.s32.totalorder %s19, 1
    %p168 = por %p166, %p167
    %p169 = scmp.ne.s32.totalorder %s158, %s159
    %p170 = scmp.eq.s32.totalorder %s19, 0
    %p171 = por %p169, %p170
    %p172 = scmp.ne.s32.totalorder %s158, %s159
    %p173 = scmp.eq.s32.totalorder %s20, 1
    %p174 = por %p172, %p173
    %p176 = scmp.ne.s32.totalorder %s159, %s175
    %p177 = scmp.eq.s32.totalorder %s20, 0
    %p178 = por %p176, %p177
    %s179 = ssub.s32 %s14, %s21
    %p180 = scmp.eq.s32.totalorder %s179, 0
    %s182 = sadd.s32 %s181, 1
    %s183 = scalar_select %p180, %s181, %s182
    %p186 = pneg %p180
    %p187 = scmp.eq.s32.totalorder %s14, 1
    %p188 = por %p186, %p187
    %p189 = scmp.ne.s32.totalorder %s181, %s184
    %p190 = scmp.eq.s32.totalorder %s14, 0
    %p191 = por %p189, %p190
    %p192 = scmp.ne.s32.totalorder %s181, %s184
    %p193 = scmp.eq.s32.totalorder %s19, 1
    %p194 = por %p192, %p193
    %p195 = scmp.ne.s32.totalorder %s184, %s185
    %p196 = scmp.eq.s32.totalorder %s19, 0
    %p197 = por %p195, %p196
    %p198 = scmp.ne.s32.totalorder %s184, %s185
    %p199 = scmp.eq.s32.totalorder %s20, 1
    %p200 = por %p198, %p199
    %p202 = scmp.ne.s32.totalorder %s185, %s201
    %p203 = scmp.eq.s32.totalorder %s20, 0
    %p204 = por %p202, %p203
    %p205 = scmp.le.s32.totalorder 1, %s14
    %p206 = scmp.lt.s32.totalorder %s14, 3
    %p207 = pnand %p205, %p206
    %p208 = pneg %p207
    // Predicated region
    $region9: #{_forward_impl.1} parent=5 // pred_check
      _
    $region10: #{_forward_impl.1} parent=5 // pred_check_branch
      %210 = sbr.rel (%p207) target = $region12
    $region11: #{_forward_impl.1} parent=5 // pred_region
      %s211 = ssub.s32 %s14, 1
      // Predicated region
      $region13: #{_forward_impl.1} parent=11 // pred_check
        %p212 = pneg %p61
      $region14: #{_forward_impl.1} parent=11 // pred_check_branch
        %214 = sbr.rel (%p212) target = $region16
      $region15: #{_forward_impl.1} parent=11 // pred_region
        _
      $region16: #{_forward_impl.1} parent=11 // pred_fallthru
        _
      // Predicated region
      $region17: #{_forward_impl.1} parent=11 // pred_check
        %p215 = pneg %p82
      $region18: #{_forward_impl.1} parent=11 // pred_check_branch
        %217 = sbr.rel (%p215) target = $region20
      $region19: #{_forward_impl.1} parent=11 // pred_region
        _
      $region20: #{_forward_impl.1} parent=11 // pred_fallthru
        _
      // Predicated region
      $region21: #{_forward_impl.1} parent=11 // pred_check
        %p218 = pneg %p103
      $region22: #{_forward_impl.1} parent=11 // pred_check_branch
        %220 = sbr.rel (%p218) target = $region24
      $region23: #{_forward_impl.1} parent=11 // pred_region
        _
      $region24: #{_forward_impl.1} parent=11 // pred_fallthru
        _
      // Predicated region
      $region25: #{_forward_impl.1} parent=11 // pred_check
        %p221 = pneg %p124
      $region26: #{_forward_impl.1} parent=11 // pred_check_branch
        %223 = sbr.rel (%p221) target = $region28
      $region27: #{_forward_impl.1} parent=11 // pred_region
        _
      $region28: #{_forward_impl.1} parent=11 // pred_fallthru
        _
      // Predicated region
      $region29: #{_forward_impl.1} parent=11 // pred_check
        %p224 = pneg %p145
      $region30: #{_forward_impl.1} parent=11 // pred_check_branch
        %226 = sbr.rel (%p224) target = $region32
      $region31: #{_forward_impl.1} parent=11 // pred_region
        _
      $region32: #{_forward_impl.1} parent=11 // pred_fallthru
        _
    $region12: #{_forward_impl.1} parent=5 // pred_fallthru
      _
    %p227 = scmp.lt.s32.totalorder %s14, 2
    // Predicated region
    $region33: #{_forward_impl.1} parent=5 // pred_check
      %p228 = pneg %p227
    $region34: #{_forward_impl.1} parent=5 // pred_check_branch
      %230 = sbr.rel (%p228) target = $region36
    $region35: #{_forward_impl.1} parent=5 // pred_region
      // Predicated region
      $region37: #{_forward_impl.1} parent=35 // pred_check
        %p231 = pneg %p34
      $region38: #{_forward_impl.1} parent=35 // pred_check_branch
        %233 = sbr.rel (%p231) target = $region40
      $region39: #{_forward_impl.1} parent=35 // pred_region
        %s234 = smul.u32 32, %s14
        %p235 = scmp.lt.s32.totalorder %s234, 63
        %s236 = scalar_select %p235, %s234, 63
        %s237 = smul.addr %s236, 4
        %s238 = scalar_lea.vmem %s0, %s237
        %s239 = smul.u32 32, %s14
      $region40: #{_forward_impl.1} parent=35 // pred_fallthru
        _
    $region36: #{_forward_impl.1} parent=5 // pred_fallthru
      _
    %p240 = scmp.le.s32.totalorder 1, %s14
    %p241 = scmp.lt.s32.totalorder %s14, 3
    %p242 = pnand %p240, %p241
    %p243 = pneg %p242
    // Predicated region
    $region41: #{_forward_impl.1} parent=5 // pred_check
      _
    $region42: #{_forward_impl.1} parent=5 // pred_check_branch
      %245 = sbr.rel (%p242) target = $region44
    $region43: #{_forward_impl.1} parent=5 // pred_region
      %s246 = ssub.s32 %s14, 1
      %s247 = smul.u32 32, %s19
      %p248 = scmp.lt.s32.totalorder %s247, 63
      %s249 = scalar_select %p248, %s247, 63
      %s250 = smul.addr %s249, 4
      %s251 = scalar_lea.vmem %s0, %s250
      %p252 = pneg %p40
      %p253 = pneg %p37
      %p254 = pneg %p61
      %p255 = pneg %p58
      %p256 = pneg %p82
      %p257 = pneg %p79
      %p258 = pneg %p103
      %p259 = pneg %p100
      %p260 = pneg %p124
      %p261 = pneg %p121
      %p262 = pneg %p145
      %p263 = pneg %p142
      %p264 = pneg %p171
      %p265 = pneg %p168
      %p266 = scmp.lt.s32.totalorder %s19, 1
      %s267 = scalar_select %p266, %s19, 1
      %s268 = smul.addr %s267, 8
      %s269 = scalar_lea.vmem %s6, %s268
      %p270 = pneg %p197
      %p271 = pneg %p194
      %p272 = scmp.lt.s32.totalorder %s19, 1
      %s273 = scalar_select %p272, %s19, 1
      %s274 = smul.addr %s273, 8
      %s275 = scalar_lea.vmem %s7, %s274
      %s276 = smul.u32 32, %s19
      %p277 = scmp.lt.s32.totalorder %s276, 63
      %s278 = scalar_select %p277, %s276, 63
      %s279 = smul.addr %s278, 4
      %s280 = scalar_lea.vmem %s0, %s279
      %s281 = smul.u32 32, %s19
      %p282 = scmp.lt.s32.totalorder %s19, 1
      %s283 = scalar_select %p282, %s19, 1
      %s284 = smul.addr %s283, 8
      %s285 = scalar_lea.vmem %s6, %s284
      %p286 = scmp.lt.s32.totalorder %s19, 1
      %s287 = scalar_select %p286, %s19, 1
      %s288 = smul.addr %s287, 8
      %s289 = scalar_lea.vmem %s7, %s288
      %v291 = vld [vmem:[%s280] sm:$0xf]
      %v292 = vld [vmem:[%s280 + $0x4] sm:$0xf]
      %v293 = vld [vmem:[%s280 + $0x8] sm:$0xf]
      %v294 = vld [vmem:[%s280 + $0xc] sm:$0xf]
      %v295 = vld [vmem:[%s280 + $0x10] sm:$0xf]
      %v296 = vld [vmem:[%s280 + $0x14] sm:$0xf]
      %v297 = vld [vmem:[%s280 + $0x18] sm:$0xf]
      %v298 = vld [vmem:[%s280 + $0x1c] sm:$0xf]
      %v299 = vld [vmem:[%s280 + $0x20] sm:$0xf]
      %v300 = vld [vmem:[%s280 + $0x24] sm:$0xf]
      %v301 = vld [vmem:[%s280 + $0x28] sm:$0xf]
      %v302 = vld [vmem:[%s280 + $0x2c] sm:$0xf]
      %v303 = vld [vmem:[%s280 + $0x30] sm:$0xf]
      %v304 = vld [vmem:[%s280 + $0x34] sm:$0xf]
      %v305 = vld [vmem:[%s280 + $0x38] sm:$0xf]
      %v306 = vld [vmem:[%s280 + $0x3c] sm:$0xf]
      %v307 = vld [vmem:[%s280 + $0x40] sm:$0xf]
      %v308 = vld [vmem:[%s280 + $0x44] sm:$0xf]
      %v309 = vld [vmem:[%s280 + $0x48] sm:$0xf]
      %v310 = vld [vmem:[%s280 + $0x4c] sm:$0xf]
      %v311 = vld [vmem:[%s280 + $0x50] sm:$0xf]
      %v312 = vld [vmem:[%s280 + $0x54] sm:$0xf]
      %v313 = vld [vmem:[%s280 + $0x58] sm:$0xf]
      %v314 = vld [vmem:[%s280 + $0x5c] sm:$0xf]
      %v315 = vld [vmem:[%s280 + $0x60] sm:$0xf]
      %v316 = vld [vmem:[%s280 + $0x64] sm:$0xf]
      %v317 = vld [vmem:[%s280 + $0x68] sm:$0xf]
      %v318 = vld [vmem:[%s280 + $0x6c] sm:$0xf]
      %v319 = vld [vmem:[%s280 + $0x70] sm:$0xf]
      %v320 = vld [vmem:[%s280 + $0x74] sm:$0xf]
      %v321 = vld [vmem:[%s280 + $0x78] sm:$0xf]
      %v322 = vld [vmem:[%s280 + $0x7c] sm:$0xf]
      %v323 = vld [vmem:[%s1] sm:$0xf]
      %v324 = vld [vmem:[%s1 + $0x4] sm:$0xf]
      %v325 = vld [vmem:[%s1 + $0x8] sm:$0xf]
      %v326 = vld [vmem:[%s1 + $0xc] sm:$0xf]
      %v359 = vunpack.c.l.b16 %v291
      %v360 = vunpack.c.l.b16 %v292
      %v361 = vunpack.c.l.b16 %v293
      %v362 = vunpack.c.l.b16 %v294
      %v363 = vunpack.c.l.b16 %v295
      %v364 = vunpack.c.l.b16 %v296
      %v365 = vunpack.c.l.b16 %v297
      %v366 = vunpack.c.l.b16 %v298
      %v367 = vunpack.c.l.b16 %v299
      %v368 = vunpack.c.l.b16 %v300
      %v369 = vunpack.c.l.b16 %v301
      %v370 = vunpack.c.l.b16 %v302
      %v371 = vunpack.c.l.b16 %v303
      %v372 = vunpack.c.l.b16 %v304
      %v373 = vunpack.c.l.b16 %v305
      %v374 = vunpack.c.l.b16 %v306
      %v375 = vunpack.c.l.b16 %v307
      %v376 = vunpack.c.l.b16 %v308
      %v377 = vunpack.c.l.b16 %v309
      %v378 = vunpack.c.l.b16 %v310
      %v379 = vunpack.c.l.b16 %v311
      %v380 = vunpack.c.l.b16 %v312
      %v381 = vunpack.c.l.b16 %v313
      %v382 = vunpack.c.l.b16 %v314
      %v383 = vunpack.c.l.b16 %v315
      %v384 = vunpack.c.l.b16 %v316
      %v385 = vunpack.c.l.b16 %v317
      %v386 = vunpack.c.l.b16 %v318
      %v387 = vunpack.c.l.b16 %v319
      %v388 = vunpack.c.l.b16 %v320
      %v389 = vunpack.c.l.b16 %v321
      %v390 = vunpack.c.l.b16 %v322
      %v391 = vpack.c.b16 %v360, %v359
      %v392 = vpack.c.b16 %v362, %v361
      %v393 = vpack.c.b16 %v364, %v363
      %v394 = vpack.c.b16 %v366, %v365
      %v395 = vpack.c.b16 %v368, %v367
      %v396 = vpack.c.b16 %v370, %v369
      %v397 = vpack.c.b16 %v372, %v371
      %v398 = vpack.c.b16 %v374, %v373
      %v399 = vpack.c.b16 %v376, %v375
      %v400 = vpack.c.b16 %v378, %v377
      %v401 = vpack.c.b16 %v380, %v379
      %v402 = vpack.c.b16 %v382, %v381
      %v403 = vpack.c.b16 %v384, %v383
      %v404 = vpack.c.b16 %v386, %v385
      %v405 = vpack.c.b16 %v388, %v387
      %v406 = vpack.c.b16 %v390, %v389
      %v411 = vunpack.c.l.b16 %v323
      %v412 = vunpack.c.l.b16 %v324
      %v413 = vunpack.c.l.b16 %v325
      %v414 = vunpack.c.l.b16 %v326
      %v415 = vpack.c.b16 %v412, %v411
      %v416 = vpack.c.b16 %v414, %v413
      %vm419 = vcmask 261120
      %v421 = vsel %vm419, %v391, 0
      %v424 = vsel %vm419, %v392, 0
      %v427 = vsel %vm419, %v393, 0
      %v430 = vsel %vm419, %v394, 0
      %v433 = vsel %vm419, %v395, 0
      %v436 = vsel %vm419, %v396, 0
      %v439 = vsel %vm419, %v397, 0
      %v442 = vsel %vm419, %v398, 0
      %v445 = vsel %vm419, %v399, 0
      %v448 = vsel %vm419, %v400, 0
      %v451 = vsel %vm419, %v401, 0
      %v454 = vsel %vm419, %v402, 0
      %v457 = vsel %vm419, %v403, 0
      %v460 = vsel %vm419, %v404, 0
      %v463 = vsel %vm419, %v405, 0
      %v466 = vsel %vm419, %v406, 0
      %468 = vmatprep.subr.bf16.mxu0 0
      %469 = vmatpush1.bf16.msra.mxu0 %v415
      %470 = vmatprep.subr.bf16.mxu0 0
      %471 = vmatpush1.bf16.msra.mxu0 %v416
      %472 = vmatprep.subr.bf16.mxu0 0
      %473 = vmatpush1.bf16.msra.mxu0 0
      %474 = vmatprep.subr.bf16.mxu0 0
      %475 = vmatpush1.bf16.msra.mxu0 0
      %476 = vmatprep.subr.bf16.mxu0 0
      %477 = vmatpush1.bf16.msra.mxu0 0
      %478 = vmatprep.subr.bf16.mxu0 0
      %479 = vmatpush1.bf16.msra.mxu0 0
      %480 = vmatprep.subr.bf16.mxu0 0
      %481 = vmatpush1.bf16.msra.mxu0 0
      %482 = vmatprep.subr.bf16.mxu0 0
      %483 = vmatpush1.bf16.msra.mxu0 0
      %484 = vmatprep.subr.bf16.mxu0 0
      %485 = vmatpush1.bf16.msra.mxu0 0
      %486 = vmatprep.subr.bf16.mxu0 0
      %487 = vmatpush1.bf16.msra.mxu0 0
      %488 = vmatprep.subr.bf16.mxu0 0
      %489 = vmatpush1.bf16.msra.mxu0 0
      %490 = vmatprep.subr.bf16.mxu0 0
      %491 = vmatpush1.bf16.msra.mxu0 0
      %492 = vmatprep.subr.bf16.mxu0 0
      %493 = vmatpush1.bf16.msra.mxu0 0
      %494 = vmatprep.subr.bf16.mxu0 0
      %495 = vmatpush1.bf16.msra.mxu0 0
      %496 = vmatprep.subr.bf16.mxu0 0
      %497 = vmatpush1.bf16.msra.mxu0 0
      %498 = vmatprep.subr.bf16.mxu0 0
      %499 = vmatpush1.bf16.msra.mxu0 0
      %500 = vmatprep.mubr.bf16.mxu0 0
      %501 = vmatmul.mubr.bf16.gmra.mrb[0].mxu0 %v421
      %v502 = vpop.f32.mrb[0].mxu0
      %v503 = vadd.f32 0.0, %v502
      %v504 = vpop.f32.mrb[0].mxu0
      %v505 = vpop.f32.mrb[0].mxu0
      %v506 = vadd.f32 0.0, %v505
      %v507 = vpop.f32.mrb[0].mxu0
      %508 = vmatprep.mubr.bf16.mxu0 0
      %509 = vmatmul.mubr.bf16.gmra.mrb[0].mxu0 %v424
      %v510 = vpop.f32.mrb[0].mxu0
      %v511 = vadd.f32 0.0, %v510
      %v512 = vpop.f32.mrb[0].mxu0
      %v513 = vpop.f32.mrb[0].mxu0
      %v514 = vadd.f32 0.0, %v513
      %v515 = vpop.f32.mrb[0].mxu0
      %516 = vmatprep.mubr.bf16.mxu0 0
      %517 = vmatmul.mubr.bf16.gmra.mrb[0].mxu0 %v427
      %v518 = vpop.f32.mrb[0].mxu0
      %v519 = vadd.f32 0.0, %v518
      %v520 = vpop.f32.mrb[0].mxu0
      %v521 = vpop.f32.mrb[0].mxu0
      %v522 = vadd.f32 0.0, %v521
      %v523 = vpop.f32.mrb[0].mxu0
      %524 = vmatprep.mubr.bf16.mxu0 0
      %525 = vmatmul.mubr.bf16.gmra.mrb[0].mxu0 %v430
      %v526 = vpop.f32.mrb[0].mxu0
      %v527 = vadd.f32 0.0, %v526
      %v528 = vpop.f32.mrb[0].mxu0
      %v529 = vpop.f32.mrb[0].mxu0
      %v530 = vadd.f32 0.0, %v529
      %v531 = vpop.f32.mrb[0].mxu0
      %532 = vmatprep.mubr.bf16.mxu0 0
      %533 = vmatmul.mubr.bf16.gmra.mrb[0].mxu0 %v433
      %v534 = vpop.f32.mrb[0].mxu0
      %v535 = vadd.f32 0.0, %v534
      %v536 = vpop.f32.mrb[0].mxu0
      %v537 = vpop.f32.mrb[0].mxu0
      %v538 = vadd.f32 0.0, %v537
      %v539 = vpop.f32.mrb[0].mxu0
      %540 = vmatprep.mubr.bf16.mxu0 0
      %541 = vmatmul.mubr.bf16.gmra.mrb[0].mxu0 %v436
      %v542 = vpop.f32.mrb[0].mxu0
      %v543 = vadd.f32 0.0, %v542
      %v544 = vpop.f32.mrb[0].mxu0
      %v545 = vpop.f32.mrb[0].mxu0
      %v546 = vadd.f32 0.0, %v545
      %v547 = vpop.f32.mrb[0].mxu0
      %548 = vmatprep.mubr.bf16.mxu0 0
      %549 = vmatmul.mubr.bf16.gmra.mrb[0].mxu0 %v439
      %v550 = vpop.f32.mrb[0].mxu0
      %v551 = vadd.f32 0.0, %v550
      %v552 = vpop.f32.mrb[0].mxu0
      %v553 = vpop.f32.mrb[0].mxu0
      %v554 = vadd.f32 0.0, %v553
      %v555 = vpop.f32.mrb[0].mxu0
      %556 = vmatprep.mubr.bf16.mxu0 0
      %557 = vmatmul.mubr.bf16.gmra.mrb[0].mxu0 %v442
      %v558 = vpop.f32.mrb[0].mxu0
      %v559 = vadd.f32 0.0, %v558
      %v560 = vpop.f32.mrb[0].mxu0
      %v561 = vpop.f32.mrb[0].mxu0
      %v562 = vadd.f32 0.0, %v561
      %v563 = vpop.f32.mrb[0].mxu0
      %564 = vmatprep.mubr.bf16.mxu0 0
      %565 = vmatmul.mubr.bf16.gmra.mrb[0].mxu0 %v445
      %v566 = vpop.f32.mrb[0].mxu0
      %v567 = vadd.f32 0.0, %v566
      %v568 = vpop.f32.mrb[0].mxu0
      %v569 = vpop.f32.mrb[0].mxu0
      %v570 = vadd.f32 0.0, %v569
      %v571 = vpop.f32.mrb[0].mxu0
      %572 = vmatprep.mubr.bf16.mxu0 0
      %573 = vmatmul.mubr.bf16.gmra.mrb[0].mxu0 %v448
      %v574 = vpop.f32.mrb[0].mxu0
      %v575 = vadd.f32 0.0, %v574
      %v576 = vpop.f32.mrb[0].mxu0
      %v577 = vpop.f32.mrb[0].mxu0
      %v578 = vadd.f32 0.0, %v577
      %v579 = vpop.f32.mrb[0].mxu0
      %580 = vmatprep.mubr.bf16.mxu0 0
      %581 = vmatmul.mubr.bf16.gmra.mrb[0].mxu0 %v451
      %v582 = vpop.f32.mrb[0].mxu0
      %v583 = vadd.f32 0.0, %v582
      %v584 = vpop.f32.mrb[0].mxu0
      %v585 = vpop.f32.mrb[0].mxu0
      %v586 = vadd.f32 0.0, %v585
      %v587 = vpop.f32.mrb[0].mxu0
      %588 = vmatprep.mubr.bf16.mxu0 0
      %589 = vmatmul.mubr.bf16.gmra.mrb[0].mxu0 %v454
      %v590 = vpop.f32.mrb[0].mxu0
      %v591 = vadd.f32 0.0, %v590
      %v592 = vpop.f32.mrb[0].mxu0
      %v593 = vpop.f32.mrb[0].mxu0
      %v594 = vadd.f32 0.0, %v593
      %v595 = vpop.f32.mrb[0].mxu0
      %596 = vmatprep.mubr.bf16.mxu0 0
      %597 = vmatmul.mubr.bf16.gmra.mrb[0].mxu0 %v457
      %v598 = vpop.f32.mrb[0].mxu0
      %v599 = vadd.f32 0.0, %v598
      %v600 = vpop.f32.mrb[0].mxu0
      %v601 = vpop.f32.mrb[0].mxu0
      %v602 = vadd.f32 0.0, %v601
      %v603 = vpop.f32.mrb[0].mxu0
      %604 = vmatprep.mubr.bf16.mxu0 0
      %605 = vmatmul.mubr.bf16.gmra.mrb[0].mxu0 %v460
      %v606 = vpop.f32.mrb[0].mxu0
      %v607 = vadd.f32 0.0, %v606
      %v608 = vpop.f32.mrb[0].mxu0
      %v609 = vpop.f32.mrb[0].mxu0
      %v610 = vadd.f32 0.0, %v609
      %v611 = vpop.f32.mrb[0].mxu0
      %612 = vmatprep.mubr.bf16.mxu0 0
      %613 = vmatmul.mubr.bf16.gmra.mrb[0].mxu0 %v463
      %v614 = vpop.f32.mrb[0].mxu0
      %v615 = vadd.f32 0.0, %v614
      %v616 = vpop.f32.mrb[0].mxu0
      %v617 = vpop.f32.mrb[0].mxu0
      %v618 = vadd.f32 0.0, %v617
      %v619 = vpop.f32.mrb[0].mxu0
      %620 = vmatprep.mubr.bf16.mxu0 0
      %621 = vmatmul.mubr.bf16.gmra.mrb[0].mxu0 %v466
      %v622 = vpop.f32.mrb[0].mxu0
      %v623 = vadd.f32 0.0, %v622
      %v624 = vpop.f32.mrb[0].mxu0
      %v625 = vpop.f32.mrb[0].mxu0
      %v626 = vadd.f32 0.0, %v625
      %v627 = vpop.f32.mrb[0].mxu0
      %628 = vdwg.mxu0
      %v629 = vmax.f32 %v503, 0.0
      %v630 = vmax.f32 %v506, 0.0
      %v631 = vmax.f32 %v511, 0.0
      %v632 = vmax.f32 %v514, 0.0
      %v633 = vmax.f32 %v519, 0.0
      %v634 = vmax.f32 %v522, 0.0
      %v635 = vmax.f32 %v527, 0.0
      %v636 = vmax.f32 %v530, 0.0
      %v637 = vmax.f32 %v535, 0.0
      %v638 = vmax.f32 %v538, 0.0
      %v639 = vmax.f32 %v543, 0.0
      %v640 = vmax.f32 %v546, 0.0
      %v641 = vmax.f32 %v551, 0.0
      %v642 = vmax.f32 %v554, 0.0
      %v643 = vmax.f32 %v559, 0.0
      %v644 = vmax.f32 %v562, 0.0
      %v645 = vmax.f32 %v567, 0.0
      %v646 = vmax.f32 %v570, 0.0
      %v647 = vmax.f32 %v575, 0.0
      %v648 = vmax.f32 %v578, 0.0
      %v649 = vmax.f32 %v583, 0.0
      %v650 = vmax.f32 %v586, 0.0
      %v651 = vmax.f32 %v591, 0.0
      %v652 = vmax.f32 %v594, 0.0
      %v653 = vmax.f32 %v599, 0.0
      %v654 = vmax.f32 %v602, 0.0
      %v655 = vmax.f32 %v607, 0.0
      %v656 = vmax.f32 %v610, 0.0
      %v657 = vmax.f32 %v615, 0.0
      %v658 = vmax.f32 %v618, 0.0
      %v659 = vmax.f32 %v623, 0.0
      %v660 = vmax.f32 %v626, 0.0
      %v661 = vld [vmem:[%s2] sm:$0xff]
      %v662 = vld [vmem:[%s2 + $0x8] sm:$0xff]
      %v663 = vld [vmem:[%s2 + $0x10] sm:$0xff]
      %v664 = vld [vmem:[%s2 + $0x18] sm:$0xff]
      %v665 = vld [vmem:[%s2 + $0x20] sm:$0xff]
      %v666 = vld [vmem:[%s2 + $0x28] sm:$0xff]
      %v667 = vld [vmem:[%s2 + $0x30] sm:$0xff]
      %v668 = vld [vmem:[%s2 + $0x38] sm:$0xff]
      %v669 = vld [vmem:[%s2 + $0x40] sm:$0xff]
      %v670 = vld [vmem:[%s2 + $0x48] sm:$0xff]
      %v671 = vld [vmem:[%s2 + $0x50] sm:$0xff]
      %v672 = vld [vmem:[%s2 + $0x58] sm:$0xff]
      %v673 = vld [vmem:[%s2 + $0x60] sm:$0xff]
      %v674 = vld [vmem:[%s2 + $0x68] sm:$0xff]
      %v675 = vld [vmem:[%s2 + $0x70] sm:$0xff]
      %v676 = vld [vmem:[%s2 + $0x78] sm:$0xff]
      %677 = vmatprep.subr.mxu0 0.0
      %678 = vmatpush1.msra.mxu0 %v629
      %679 = vmatprep.subr.mxu0 0.0
      %680 = vmatpush1.msra.mxu0 %v630
      %681 = vmatprep.subr.mxu0 0.0
      %682 = vmatpush1.msra.mxu0 %v631
      %683 = vmatprep.subr.mxu0 0.0
      %684 = vmatpush1.msra.mxu0 %v632
      %685 = vmatprep.subr.mxu0 0.0
      %686 = vmatpush1.msra.mxu0 %v633
      %687 = vmatprep.subr.mxu0 0.0
      %688 = vmatpush1.msra.mxu0 %v634
      %689 = vmatprep.subr.mxu0 0.0
      %690 = vmatpush1.msra.mxu0 %v635
      %691 = vmatprep.subr.mxu0 0.0
      %692 = vmatpush1.msra.mxu0 %v636
      %693 = vmatprep.subr.mxu0 0.0
      %694 = vmatpush1.msra.mxu0 %v637
      %695 = vmatprep.subr.mxu0 0.0
      %696 = vmatpush1.msra.mxu0 %v638
      %697 = vmatprep.subr.mxu0 0.0
      %698 = vmatpush1.msra.mxu0 %v639
      %699 = vmatprep.subr.mxu0 0.0
      %700 = vmatpush1.msra.mxu0 %v640
      %701 = vmatprep.subr.mxu0 0.0
      %702 = vmatpush1.msra.mxu0 %v641
      %703 = vmatprep.subr.mxu0 0.0
      %704 = vmatpush1.msra.mxu0 %v642
      %705 = vmatprep.subr.mxu0 0.0
      %706 = vmatpush1.msra.mxu0 %v643
      %707 = vmatprep.subr.mxu0 0.0
      %708 = vmatpush1.msra.mxu0 %v644
      %709 = vmatprep.subr.mxu0 0.0
      %710 = vmatpush1.msra.mxu0 %v645
      %711 = vmatprep.subr.mxu0 0.0
      %712 = vmatpush1.msra.mxu0 %v646
      %713 = vmatprep.subr.mxu0 0.0
      %714 = vmatpush1.msra.mxu0 %v647
      %715 = vmatprep.subr.mxu0 0.0
      %716 = vmatpush1.msra.mxu0 %v648
      %717 = vmatprep.subr.mxu0 0.0
      %718 = vmatpush1.msra.mxu0 %v649
      %719 = vmatprep.subr.mxu0 0.0
      %720 = vmatpush1.msra.mxu0 %v650
      %721 = vmatprep.subr.mxu0 0.0
      %722 = vmatpush1.msra.mxu0 %v651
      %723 = vmatprep.subr.mxu0 0.0
      %724 = vmatpush1.msra.mxu0 %v652
      %725 = vmatprep.subr.mxu0 0.0
      %726 = vmatpush1.msra.mxu0 %v653
      %727 = vmatprep.subr.mxu0 0.0
      %728 = vmatpush1.msra.mxu0 %v654
      %729 = vmatprep.subr.mxu0 0.0
      %730 = vmatpush1.msra.mxu0 %v655
      %731 = vmatprep.subr.mxu0 0.0
      %732 = vmatpush1.msra.mxu0 %v656
      %733 = vmatprep.subr.mxu0 0.0
      %734 = vmatpush1.msra.mxu0 %v657
      %735 = vmatprep.subr.mxu0 0.0
      %736 = vmatpush1.msra.mxu0 %v658
      %737 = vmatprep.subr.mxu0 0.0
      %738 = vmatpush1.msra.mxu0 %v659
      %739 = vmatprep.subr.mxu0 0.0
      %740 = vmatpush1.msra.mxu0 %v660
      %741 = vmatprep.mubr.f32.mxu0 %v662
      %742 = vmatmul.mubr.f32.gmra.mrb[0].mxu0 %v661
      %v743 = vpop.f32.mrb[0].mxu0
      %v744 = vadd.f32 0.0, %v743
      %v745 = vpop.f32.mrb[0].mxu0
      %746 = vmatprep.mubr.f32.mxu0 %v664
      %747 = vmatmul.mubr.f32.gmra.mrb[0].mxu0 %v663
      %v748 = vpop.f32.mrb[0].mxu0
      %v749 = vadd.f32 0.0, %v748
      %v750 = vpop.f32.mrb[0].mxu0
      %751 = vmatprep.mubr.f32.mxu0 %v666
      %752 = vmatmul.mubr.f32.gmra.mrb[0].mxu0 %v665
      %v753 = vpop.f32.mrb[0].mxu0
      %v754 = vadd.f32 0.0, %v753
      %v755 = vpop.f32.mrb[0].mxu0
      %756 = vmatprep.mubr.f32.mxu0 %v668
      %757 = vmatmul.mubr.f32.gmra.mrb[0].mxu0 %v667
      %v758 = vpop.f32.mrb[0].mxu0
      %v759 = vadd.f32 0.0, %v758
      %v760 = vpop.f32.mrb[0].mxu0
      %761 = vmatprep.mubr.f32.mxu0 %v670
      %762 = vmatmul.mubr.f32.gmra.mrb[0].mxu0 %v669
      %v763 = vpop.f32.mrb[0].mxu0
      %v764 = vadd.f32 0.0, %v763
      %v765 = vpop.f32.mrb[0].mxu0
      %766 = vmatprep.mubr.f32.mxu0 %v672
      %767 = vmatmul.mubr.f32.gmra.mrb[0].mxu0 %v671
      %v768 = vpop.f32.mrb[0].mxu0
      %v769 = vadd.f32 0.0, %v768
      %v770 = vpop.f32.mrb[0].mxu0
      %771 = vmatprep.mubr.f32.mxu0 %v674
      %772 = vmatmul.mubr.f32.gmra.mrb[0].mxu0 %v673
      %v773 = vpop.f32.mrb[0].mxu0
      %v774 = vadd.f32 0.0, %v773
      %v775 = vpop.f32.mrb[0].mxu0
      %776 = vmatprep.mubr.f32.mxu0 %v676
      %777 = vmatmul.mubr.f32.gmra.mrb[0].mxu0 %v675
      %v778 = vpop.f32.mrb[0].mxu0
      %v779 = vadd.f32 0.0, %v778
      %v780 = vpop.f32.mrb[0].mxu0
      %781 = vdwg.mxu0
      %v782 = vld [vmem:[%s3] sm:$0xff]
      %v783 = vld [vmem:[%s4] sm:$0xff]
      %v784 = vld [vmem:[%s4 + $0x8] sm:$0xff]
      %v785 = vld [vmem:[%s4 + $0x10] sm:$0xff]
      %v786 = vld [vmem:[%s4 + $0x18] sm:$0xff]
      %v787 = vld [vmem:[%s4 + $0x20] sm:$0xff]
      %v788 = vld [vmem:[%s4 + $0x28] sm:$0xff]
      %v789 = vld [vmem:[%s4 + $0x30] sm:$0xff]
      %v790 = vld [vmem:[%s4 + $0x38] sm:$0xff]
      %v791 = vld [vmem:[%s5] sm:$0x3]
      %v793 = vlaneseq
      %v794 = vshrl.u32 %v793, 7
      %v795 = vsub.s32 0, %v794
      %v796 = vrot.slane %v791, %v795
      %v797 = vlaneseq
      %v798 = vshrl.u32 %v797, 7
      %v799 = vsub.s32 1, %v798
      %v800 = vrot.slane %v791, %v799
      %v804 = vsel %vm419, %v782, 0
      %806 = vmatprep.subr.mxu0 %v784
      %807 = vmatpush1.msra.mxu0 %v783
      %808 = vmatprep.subr.mxu0 %v786
      %809 = vmatpush1.msra.mxu0 %v785
      %810 = vmatprep.subr.mxu0 %v788
      %811 = vmatpush1.msra.mxu0 %v787
      %812 = vmatprep.subr.mxu0 %v790
      %813 = vmatpush1.msra.mxu0 %v789
      %814 = vmatprep.subr.mxu0 0.0
      %815 = vmatpush1.msra.mxu0 0.0
      %816 = vmatprep.subr.mxu0 0.0
      %817 = vmatpush1.msra.mxu0 0.0
      %818 = vmatprep.subr.mxu0 0.0
      %819 = vmatpush1.msra.mxu0 0.0
      %820 = vmatprep.subr.mxu0 0.0
      %821 = vmatpush1.msra.mxu0 0.0
      %822 = vmatprep.subr.mxu0 0.0
      %823 = vmatpush1.msra.mxu0 0.0
      %824 = vmatprep.subr.mxu0 0.0
      %825 = vmatpush1.msra.mxu0 0.0
      %826 = vmatprep.subr.mxu0 0.0
      %827 = vmatpush1.msra.mxu0 0.0
      %828 = vmatprep.subr.mxu0 0.0
      %829 = vmatpush1.msra.mxu0 0.0
      %830 = vmatprep.subr.mxu0 0.0
      %831 = vmatpush1.msra.mxu0 0.0
      %832 = vmatprep.subr.mxu0 0.0
      %833 = vmatpush1.msra.mxu0 0.0
      %834 = vmatprep.subr.mxu0 0.0
      %835 = vmatpush1.msra.mxu0 0.0
      %836 = vmatprep.subr.mxu0 0.0
      %837 = vmatpush1.msra.mxu0 0.0
      %838 = vmatprep.subr.mxu0 0.0
      %839 = vmatpush1.msra.mxu0 0.0
      %840 = vmatprep.subr.mxu0 0.0
      %841 = vmatpush1.msra.mxu0 0.0
      %842 = vmatprep.subr.mxu0 0.0
      %843 = vmatpush1.msra.mxu0 0.0
      %844 = vmatprep.subr.mxu0 0.0
      %845 = vmatpush1.msra.mxu0 0.0
      %846 = vmatprep.subr.mxu0 0.0
      %847 = vmatpush1.msra.mxu0 0.0
      %848 = vmatprep.subr.mxu0 0.0
      %849 = vmatpush1.msra.mxu0 0.0
      %850 = vmatprep.subr.mxu0 0.0
      %851 = vmatpush1.msra.mxu0 0.0
      %852 = vmatprep.subr.mxu0 0.0
      %853 = vmatpush1.msra.mxu0 0.0
      %854 = vmatprep.subr.mxu0 0.0
      %855 = vmatpush1.msra.mxu0 0.0
      %856 = vmatprep.subr.mxu0 0.0
      %857 = vmatpush1.msra.mxu0 0.0
      %858 = vmatprep.subr.mxu0 0.0
      %859 = vmatpush1.msra.mxu0 0.0
      %860 = vmatprep.subr.mxu0 0.0
      %861 = vmatpush1.msra.mxu0 0.0
      %862 = vmatprep.subr.mxu0 0.0
      %863 = vmatpush1.msra.mxu0 0.0
      %864 = vmatprep.subr.mxu0 0.0
      %865 = vmatpush1.msra.mxu0 0.0
      %866 = vmatprep.subr.mxu0 0.0
      %867 = vmatpush1.msra.mxu0 0.0
      %868 = vmatprep.subr.mxu0 0.0
      %869 = vmatpush1.msra.mxu0 0.0
      %870 = vmatprep.mubr.f32.mxu0 0.0
      %871 = vmatmul.mubr.f32.gmra.mrb[0].mxu0 %v804
      %v872 = vpop.f32.mrb[0].mxu0
      %v873 = vadd.f32 %v796, %v872
      %v874 = vpop.f32.mrb[0].mxu0
      %v875 = vadd.f32 %v800, %v874
      %876 = vdwg.mxu0
      %v877 = vlaneseq
      %v878 = vand.u32 %v877, 127
      %v879 = vadd.s32 %v878, 128
      %vm880 = vcmp.lt.s32.totalorder %v878, 5
      %vm881 = vcmp.lt.s32.totalorder %v879, 5
      %v882 = vsel %vm880, %v873, -inf
      %v883 = vsel %vm881, %v875, -inf
      %v884 = vmax.f32 %v882, %v883
      %885 = vmax.xlane.f32.xlu0 %v884
      %v886 = vpop.xlane.xlu0 %885
      %v887 = vsub.f32 %v882, %v886
      %v888 = vsub.f32 %v883, %v886
      %v889 = vmul.f32 %v887, 1.442695
      %v890 = vpow.pop %v889
      %v891 = vmul.f32 %v888, 1.442695
      %v892 = vpow.pop %v891
      %v893 = vadd.f32 %v890, %v892
      %894 = vadd.xlane.f32.xlu0 %v893
      %v895 = vpop.xlane.xlu0 %894
      %v896 = vrcp.pop %v895
      %v897 = vmul.f32 %v890, %v896
      %898 = vst [vmem:[%s285] sm:$0xff] %v897
      %899 = vmatprep.subr.mxu0 0.0
      %900 = vmatpush1.xpose.msra.mxu0 %v744
      %901 = vmatprep.subr.mxu0 0.0
      %902 = vmatpush1.xpose.msra.mxu0 %v749
      %903 = vmatprep.subr.mxu0 0.0
      %904 = vmatpush1.xpose.msra.mxu0 %v754
      %905 = vmatprep.subr.mxu0 0.0
      %906 = vmatpush1.xpose.msra.mxu0 %v759
      %907 = vmatprep.subr.mxu0 0.0
      %908 = vmatpush1.xpose.msra.mxu0 %v764
      %909 = vmatprep.subr.mxu0 0.0
      %910 = vmatpush1.xpose.msra.mxu0 %v769
      %911 = vmatprep.subr.mxu0 0.0
      %912 = vmatpush1.xpose.msra.mxu0 %v774
      %913 = vmatprep.subr.mxu0 0.0
      %914 = vmatpush1.xpose.msra.mxu0 %v779
      %915 = vmatprep.subr.mxu0 0.0
      %916 = vmatpush1.xpose.msra.mxu0 0.0
      %917 = vmatprep.subr.mxu0 0.0
      %918 = vmatpush1.xpose.msra.mxu0 0.0
      %919 = vmatprep.subr.mxu0 0.0
      %920 = vmatpush1.xpose.msra.mxu0 0.0
      %921 = vmatprep.subr.mxu0 0.0
      %922 = vmatpush1.xpose.msra.mxu0 0.0
      %923 = vmatprep.subr.mxu0 0.0
      %924 = vmatpush1.xpose.msra.mxu0 0.0
      %925 = vmatprep.subr.mxu0 0.0
      %926 = vmatpush1.xpose.msra.mxu0 0.0
      %927 = vmatprep.subr.mxu0 0.0
      %928 = vmatpush1.xpose.msra.mxu0 0.0
      %929 = vmatprep.subr.mxu0 0.0
      %930 = vmatpush1.xpose.msra.mxu0 0.0
      %931 = vmatprep.subr.mxu0 0.0
      %932 = vmatpush1.xpose.msra.mxu0 0.0
      %933 = vmatprep.subr.mxu0 0.0
      %934 = vmatpush1.xpose.msra.mxu0 0.0
      %935 = vmatprep.subr.mxu0 0.0
      %936 = vmatpush1.xpose.msra.mxu0 0.0
      %937 = vmatprep.subr.mxu0 0.0
      %938 = vmatpush1.xpose.msra.mxu0 0.0
      %939 = vmatprep.subr.mxu0 0.0
      %940 = vmatpush1.xpose.msra.mxu0 0.0
      %941 = vmatprep.subr.mxu0 0.0
      %942 = vmatpush1.xpose.msra.mxu0 0.0
      %943 = vmatprep.subr.mxu0 0.0
      %944 = vmatpush1.xpose.msra.mxu0 0.0
      %945 = vmatprep.subr.mxu0 0.0
      %946 = vmatpush1.xpose.msra.mxu0 0.0
      %947 = vmatprep.subr.mxu0 0.0
      %948 = vmatpush1.xpose.msra.mxu0 0.0
      %949 = vmatprep.subr.mxu0 0.0
      %950 = vmatpush1.xpose.msra.mxu0 0.0
      %951 = vmatprep.subr.mxu0 0.0
      %952 = vmatpush1.xpose.msra.mxu0 0.0
      %953 = vmatprep.subr.mxu0 0.0
      %954 = vmatpush1.xpose.msra.mxu0 0.0
      %955 = vmatprep.subr.mxu0 0.0
      %956 = vmatpush1.xpose.msra.mxu0 0.0
      %957 = vmatprep.subr.mxu0 0.0
      %958 = vmatpush1.xpose.msra.mxu0 0.0
      %959 = vmatprep.subr.mxu0 0.0
      %960 = vmatpush1.xpose.msra.mxu0 0.0
      %961 = vmatprep.subr.mxu0 0.0
      %962 = vmatpush1.xpose.msra.mxu0 0.0
      %963 = vmatprep.mubr.f32.mxu0 0.0
      %964 = vmatmul.mubr.f32.gmra.mrb[0].mxu0 %v875
      %v965 = vpop.f32.mrb[0].mxu0
      %v966 = vadd.f32 0.0, %v965
      %v967 = vpop.f32.mrb[0].mxu0
      %968 = vdwg.mxu0
      %vm969 = vcmask 523264
      %970 = vst.msk [vmem:[%s289] sm:$0xff] %vm969, %v966
      %p971 = scmp.lt.s32.totalorder %s19, 1
      %s972 = scalar_select %p971, %s19, 1
      %s973 = smul.addr %s972, 8
      %s974 = scalar_lea.vmem %s6, %s973
      %p975 = scmp.lt.s32.totalorder %s19, 1
      %s976 = scalar_select %p975, %s19, 1
      %s977 = smul.addr %s976, 8
      %s978 = scalar_lea.vmem %s7, %s977
      // Predicated region
      $region45: #{_forward_impl.1} parent=43 // pred_check
        %p979 = pneg %p168
      $region46: #{_forward_impl.1} parent=43 // pred_check_branch
        %981 = sbr.rel (%p979) target = $region48
      $region47: #{_forward_impl.1} parent=43 // pred_region
        _
      $region48: #{_forward_impl.1} parent=43 // pred_fallthru
        _
      // Predicated region
      $region49: #{_forward_impl.1} parent=43 // pred_check
        %p982 = pneg %p194
      $region50: #{_forward_impl.1} parent=43 // pred_check_branch
        %984 = sbr.rel (%p982) target = $region52
      $region51: #{_forward_impl.1} parent=43 // pred_region
        _
      $region52: #{_forward_impl.1} parent=43 // pred_fallthru
        _
    $region44: #{_forward_impl.1} parent=5 // pred_fallthru
      _
    %p985 = scmp.le.s32.totalorder 2, %s14
    // Predicated region
    $region53: #{_forward_impl.1} parent=5 // pred_check
      %p986 = pneg %p985
    $region54: #{_forward_impl.1} parent=5 // pred_check_branch
      %988 = sbr.rel (%p986) target = $region56
    $region55: #{_forward_impl.1} parent=5 // pred_region
      %s989 = ssub.s32 %s14, 2
      // Predicated region
      $region57: #{_forward_impl.1} parent=55 // pred_check
        %p990 = pneg %p174
      $region58: #{_forward_impl.1} parent=55 // pred_check_branch
        %992 = sbr.rel (%p990) target = $region60
      $region59: #{_forward_impl.1} parent=55 // pred_region
        %p993 = scmp.lt.s32.totalorder %s20, 1
        %s994 = scalar_select %p993, %s20, 1
        %s995 = smul.addr %s994, 8
        %s996 = scalar_lea.vmem %s6, %s995
      $region60: #{_forward_impl.1} parent=55 // pred_fallthru
        _
      // Predicated region
      $region61: #{_forward_impl.1} parent=55 // pred_check
        %p997 = pneg %p200
      $region62: #{_forward_impl.1} parent=55 // pred_check_branch
        %999 = sbr.rel (%p997) target = $region64
      $region63: #{_forward_impl.1} parent=55 // pred_region
        %p1000 = scmp.lt.s32.totalorder %s20, 1
        %s1001 = scalar_select %p1000, %s20, 1
        %s1002 = smul.addr %s1001, 8
        %s1003 = scalar_lea.vmem %s7, %s1002
      $region64: #{_forward_impl.1} parent=55 // pred_fallthru
        _
    $region56: #{_forward_impl.1} parent=5 // pred_fallthru
      _
  $region6: #{_forward_impl.1} parent=0 // loop_footer
    %s18 = sadd.s32 1, %s14
  $region7: #{_forward_impl.1} parent=0 // loop_footer_branch
    %13 = sbr.rel target = $region3
  $region8: #{_forward_impl.1} parent=0 // loop_exit
    _

</llo_original>
